<compile_context>
chip_gen: v5e
topology: v5e:2x2
jax: 0.10.0
libtpu: 0.0.40
codegen_flags: <defaults>
</compile_context>

<pallas_src>
import functools

import jax
import jax.numpy as jnp
from jax import lax
from jax.experimental import pallas as pl
from jax.experimental.pallas import tpu as pltpu


_MXU_COSINE_MIN_C = 512  # below this, the XLU lane reduction is already cheap


def _round_up(x, m):
    return ((x + m - 1) // m) * m


def _cdiv(a, b):
    return -(-a // b)


def _device_kind():
    try:
        return jax.devices()[0].device_kind.lower()
    except Exception:  # pragma: no cover - defensive, detection only tunes defaults
        return ""


def _kd_kernel(scale_ref, student_ref, teachers_ref, labels_ref, out_ref,
               tcache_ref, *, temperature, label_smoothing, num_teachers,
               batch_size, tiles_per_core, use_mxu_cosine):
    eps = 1e-8
    p_idx = pl.program_id(0)      # core-split axis (v7x megacore)
    t_idx = pl.program_id(1)      # batch-tile reduction axis

    # Zero this core's resident accumulator block at the start of its reduction loop.
    @pl.when(t_idx == 0)
    def _init():
        out_ref[...] = jnp.zeros_like(out_ref)

    inv_adaptive_temp = scale_ref[0, 0]          # per-epoch SMEM scalar (no recompile)
    inv_temp = 1.0 / temperature

    s_raw = student_ref[...]                     # native dtype (bf16 in production)
    s = s_raw.astype(jnp.float32)                # cast once in VMEM
    tb, C = s.shape

    def row_sum_exact(x):                        # XLU lane reduction, exact f32
        return jnp.sum(x, axis=1, keepdims=True)

    if use_mxu_cosine:
        # Cosine-similarity reductions tolerate bf16-rounded addends: feed the
        # otherwise-idle MXU with native-bf16 products, accumulate in f32.
        # (ones_c is a trace constant; iotas below are likewise per-step constants
        #  — measured as free filler, so they are not hoisted into scratch.)
        ones_c = jnp.ones((C, 1), s_raw.dtype)

        def row_sum_cos(x_narrow):
            return jnp.dot(x_narrow, ones_c, preferred_element_type=jnp.float32)

    # Mask for rows that are batch padding (B rounded up to the tile grid).
    row0 = (p_idx * tiles_per_core + t_idx) * tb
    local_row = lax.broadcasted_iota(jnp.int32, (tb, 1), 0)
    mask = ((row0 + local_row) < batch_size).astype(jnp.float32)         # (tb, 1)

    # --- cosine similarity(student, teacher_t, dim=1), scaled by 1/adaptive_temp --
    if use_mxu_cosine:
        s_sq = row_sum_cos(s_raw * s_raw)
    else:
        s_sq = row_sum_exact(s * s)

    sims_scaled = []
    for ti in range(num_teachers):
        t_raw = teachers_ref[ti]
        t = t_raw.astype(jnp.float32)
        tcache_ref[ti] = t                        # f32 teacher cache (reused below)
        if use_mxu_cosine:
            dot = row_sum_cos(s_raw * t_raw)
            t_sq = row_sum_cos(t_raw * t_raw)
        else:
            dot = row_sum_exact(s * t)
            t_sq = row_sum_exact(t * t)
        inv_norm = lax.rsqrt(jnp.maximum(s_sq * t_sq, eps * eps))        # EUP
        sims_scaled.append(dot * inv_norm * inv_adaptive_temp)           # (tb, 1)

    # --- softmax over the teacher axis -> per-row teacher weights -----------------
    m = sims_scaled[0]
    for sc in sims_scaled[1:]:
        m = jnp.maximum(m, sc)
    exps = [jnp.exp(sc - m) for sc in sims_scaled]
    z = exps[0]
    for e in exps[1:]:
        z = z + e
    inv_z = pl.reciprocal(z)
    weights = [e * inv_z for e in exps]                                  # (tb, 1)

    # --- weighted teacher logits, already divided by T (1/T folded into the narrow
    #     per-row weights; teachers reused from the f32 cache, no second cast) -----
    wt = (weights[0] * inv_temp) * tcache_ref[0]
    for ti in range(1, num_teachers):
        wt = wt + (weights[ti] * inv_temp) * tcache_ref[ti]

    # --- student shifted logits (shared by KD and CE) ------------------------------
    s_max = jnp.max(s, axis=1, keepdims=True)
    d = s - s_max                        # s - max(s)        (<= 0, stable)
    d_over_T = d * inv_temp              # s/T - max(s/T)
    st_z = row_sum_exact(jnp.exp(d_over_T))
    s_z = row_sum_exact(jnp.exp(d))

    # --- KD: KLDiv(log_softmax(s/T), softmax(weighted/T)), fused per-row -----------
    wt_m = jnp.max(wt, axis=1, keepdims=True)
    wt_shift = wt - wt_m
    wt_e = jnp.exp(wt_shift)
    wt_z = row_sum_exact(wt_e)
    kl_inner = row_sum_exact(wt_e * (wt_shift - d_over_T))
    kl_per_row = (kl_inner * pl.reciprocal(wt_z)
                  + jnp.log(st_z) - jnp.log(wt_z))                       # (tb, 1)

    # --- CE with label smoothing, fused per-row -------------------------------------
    # CE = -[(1-ls)*s[label] + (ls/C)*sum(s)] + max(s) + log(s_z)
    class_ids = lax.broadcasted_iota(jnp.int32, (tb, C), 1)
    onehot_sel = class_ids == labels_ref[...]
    if use_mxu_cosine:
        picked = row_sum_cos(jnp.where(onehot_sel, s_raw, jnp.zeros_like(s_raw)))
        s_sum = row_sum_cos(s_raw)
    else:
        picked = row_sum_exact(jnp.where(onehot_sel, s, 0.0))
        s_sum = row_sum_exact(s)
    ce_per_row = (-((1.0 - label_smoothing) * picked
                    + (label_smoothing / C) * s_sum)
                  + s_max + jnp.log(s_z))                                # (tb, 1)

    # --- masked partial sums packed into one lane-dense (1,1,128) block -------------
    kd_part = jnp.sum(mask * kl_per_row, axis=0, keepdims=True)          # (1, 1)
    ce_part = jnp.sum(mask * ce_per_row, axis=0, keepdims=True)
    lanes = out_ref.shape[-1]
    lane = lax.broadcasted_iota(jnp.int32, (1, 1, lanes), 2)
    packed = (jnp.where(lane == 0, kd_part.reshape(1, 1, 1), 0.0)
              + jnp.where(lane == 1, ce_part.reshape(1, 1, 1), 0.0))
    for ti, w in enumerate(weights):
        w_part = jnp.sum(mask * w, axis=0, keepdims=True)                # (1, 1)
        packed = packed + jnp.where(lane == 2 + ti, w_part.reshape(1, 1, 1), 0.0)
    out_ref[...] += packed


def aggressive_kd_forward(student, teachers, labels, *, alpha=0.7,
                          temperature=4.0, label_smoothing=0.1, epoch=0,
                          block_rows=512, num_core_splits=None):
    """Pallas version of AggressiveKnowledgeDistillation.forward.

    student:  (B, C) logits — native dtype (bf16 recommended in production)
    teachers: (T, B, C) stacked teacher logits (native dtype)
    labels:   (B,) integer class labels
    """
    T, B, C = teachers.shape
    assert student.shape == (B, C)
    assert T <= 126, "teacher count must fit in the packed 128-lane output"
    adaptive_temp = max(0.05, 0.3 * (1.0 - epoch / 200.0))

    # ---- chip-aware defaults ------------------------------------------------------
    kind = _device_kind()
    is_v7 = "v7" in kind
    if is_v7:                                            # 64 MiB VMEM/TC, 2 TCs/chip
        ws_target, vmem_cap = 36 << 20, 44 << 20
    elif any(v in kind for v in ("v4", "v5", "v6")):     # 128 MiB VMEM parts
        ws_target, vmem_cap = 88 << 20, 100 << 20
    else:                                                # unknown part: stay conservative
        ws_target, vmem_cap = 24 << 20, 32 << 20
    if num_core_splits is None:
        num_core_splits = 2 if is_v7 else 1
    ncores = max(1, int(num_core_splits))

    s_item = student.dtype.itemsize
    t_item = teachers.dtype.itemsize
    # Sublane granule of the packed vreg layout (8 for f32, 16 for bf16, 32 for 1-byte).
    granule = max(8, 32 // max(1, min(s_item, t_item)))

    tb = min(int(block_rows), _round_up(_cdiv(B, ncores), granule))
    tb = max(granule, _round_up(tb, granule))

    def vmem_estimate(tb_):
        io = 2 * (tb_ * C * s_item + T * tb_ * C * t_item + tb_ * 4)   # double-buffered IO
        scratch = T * tb_ * C * 4                                      # f32 teacher cache
        tmp = 7 * tb_ * C * 4                                          # live f32 temporaries
        return io + scratch + tmp + (64 << 10)

    while vmem_estimate(tb) > ws_target and tb > granule:
        tb = max(granule, ((tb // 2) // granule) * granule)
    ntiles = _cdiv(B, ncores * tb)
    b_pad = ncores * ntiles * tb

    labels2d = labels.reshape(B, 1).astype(jnp.int32)
    if b_pad != B:
        pad = b_pad - B
        student = jnp.pad(student, ((0, pad), (0, 0)))
        teachers = jnp.pad(teachers, ((0, 0), (0, pad), (0, 0)))
        labels2d = jnp.pad(labels2d, ((0, pad), (0, 0)))

    # Per-epoch scalar lives in SMEM -> no Mosaic recompile every epoch.
    scale = jnp.full((1, 1), 1.0 / adaptive_temp, dtype=jnp.float32)

    use_mxu_cosine = (C >= _MXU_COSINE_MIN_C
                      and student.dtype == jnp.bfloat16
                      and teachers.dtype == jnp.bfloat16)

    kernel = functools.partial(
        _kd_kernel,
        temperature=float(temperature),
        label_smoothing=float(label_smoothing),
        num_teachers=T,
        batch_size=B,
        tiles_per_core=ntiles,
        use_mxu_cosine=use_mxu_cosine,
    )

    lanes = 128
    in_specs = [
        pl.BlockSpec(memory_space=pltpu.MemorySpace.SMEM),               # 1/adaptive_temp
        pl.BlockSpec((tb, C), lambda p, i: (p * ntiles + i, 0)),         # student
        pl.BlockSpec((T, tb, C), lambda p, i: (0, p * ntiles + i, 0)),   # teachers
        pl.BlockSpec((tb, 1), lambda p, i: (p * ntiles + i, 0)),         # labels
    ]
    out_specs = pl.BlockSpec((1, 1, lanes), lambda p, i: (p, 0, 0))      # packed partials
    out_shape = jax.ShapeDtypeStruct((ncores, 1, lanes), jnp.float32)
    scratch_shapes = [pltpu.VMEM((T, tb, C), jnp.float32)]               # f32 teacher cache

    vmem_limit = int(min(max(vmem_estimate(tb) * 5 // 4, 16 << 20), vmem_cap))

    def run(dim_sem):
        return pl.pallas_call(
            kernel,
            out_shape=out_shape,
            grid=(ncores, ntiles),
            in_specs=in_specs,
            out_specs=out_specs,
            scratch_shapes=scratch_shapes,
            compiler_params=pltpu.CompilerParams(
                dimension_semantics=dim_sem,
                vmem_limit_bytes=vmem_limit),
        )(scale, student, teachers, labels2d)

    if ncores > 1:
        # v7x: the leading axis must truly split across the two TensorCores.
        # CORE_PARALLEL is the semantics that reliably does so; fall back to plain
        # "parallel" if this Mosaic build rejects it for pallas_call grids.
        try:
            packed = run((pltpu.CORE_PARALLEL, pltpu.ARBITRARY))
        except Exception:
            packed = run((pltpu.PARALLEL, pltpu.ARBITRARY))
    else:
        packed = run((pltpu.PARALLEL, pltpu.ARBITRARY))

    # Tiny final reduction / scaling in the wrapper.
    sums = jnp.sum(packed, axis=(0, 1))                  # (128,)
    inv_b = 1.0 / B
    kd = sums[0] * (float(temperature) ** 2 * inv_b)
    ce = sums[1] * inv_b
    tw = sums[2:2 + T] * inv_b                           # (T,)
    total = alpha * kd + (1.0 - alpha) * ce
    # TODO(synk): the PyTorch module returns kd/ce via .item() and weights via
    # .cpu().tolist(); we return on-device JAX scalars/arrays instead of forcing a
    # host sync.
    return {"total_loss": total, "kd_loss": kd, "ce_loss": ce,
            "teacher_weights": tw}


def _reference(student, teachers, labels, alpha, temperature, label_smoothing,
               epoch):
    """Pure-JAX reference mirroring the PyTorch forward (f32 math)."""
    eps = 1e-8
    student = student.astype(jnp.float32)
    teachers = teachers.astype(jnp.float32)
    T, B, C = teachers.shape
    s_sq = jnp.sum(student * student, axis=1)
    sims = []
    for t in teachers:
        t_sq = jnp.sum(t * t, axis=1)
        sims.append(jnp.sum(student * t, axis=1)
                    / jnp.sqrt(jnp.maximum(s_sq * t_sq, eps * eps)))
    sims = jnp.stack(sims)                                    # (T, B)
    adaptive_temp = max(0.05, 0.3 * (1.0 - epoch / 200.0))
    weights = jax.nn.softmax(sims / adaptive_temp, axis=0)    # (T, B)
    weighted_teacher = jnp.sum(weights[:, :, None] * teachers, axis=0)

    log_q = jax.nn.log_softmax(student / temperature, axis=1)
    p = jax.nn.softmax(weighted_teacher / temperature, axis=1)
    kd = jnp.sum(p * (jnp.log(p) - log_q)) / B * temperature ** 2

    log_sp = jax.nn.log_softmax(student, axis=1)
    nll = -log_sp[jnp.arange(B), labels]
    smooth = -jnp.mean(log_sp, axis=1)
    ce = jnp.mean((1.0 - label_smoothing) * nll + label_smoothing * smooth)

    total = alpha * kd + (1.0 - alpha) * ce
    return total, kd, ce, jnp.mean(weights, axis=1)


if __name__ == "__main__":
    alpha, temperature, label_smoothing, epoch = 0.7, 4.0, 0.1, 3

    def check(student, teachers, labels, tol):
        out = aggressive_kd_forward(student, teachers, labels, alpha=alpha,
                                    temperature=temperature,
                                    label_smoothing=label_smoothing,
                                    epoch=epoch)
        jax.block_until_ready(out["total_loss"])
        ref_total, ref_kd, ref_ce, ref_tw = _reference(
            student, teachers, labels, alpha, temperature, label_smoothing,
            epoch)
        assert jnp.allclose(out["total_loss"], ref_total, atol=tol, rtol=tol), \
            (out["total_loss"], ref_total)
        assert jnp.allclose(out["kd_loss"], ref_kd, atol=tol, rtol=tol), \
            (out["kd_loss"], ref_kd)
        assert jnp.allclose(out["ce_loss"], ref_ce, atol=tol, rtol=tol), \
            (out["ce_loss"], ref_ce)
        assert jnp.allclose(out["teacher_weights"], ref_tw, atol=tol, rtol=tol), \
            (out["teacher_weights"], ref_tw)

    # Case 1: small f32 logits (original toy shapes); XLU reduction path.
    B, C, T = 8, 32, 3
    k1, k2, k3 = jax.random.split(jax.random.PRNGKey(0), 3)
    student = jax.random.normal(k1, (B, C), dtype=jnp.float32)
    teachers = jax.random.normal(k2, (T, B, C), dtype=jnp.float32)
    labels = jax.random.randint(k3, (B,), 0, C, dtype=jnp.int32)
    check(student, teachers, labels, tol=3e-4)

    # Case 2: bf16 ingest with a ragged batch -> exercises padding/masking and the
    # 16-sublane bf16 tile rounding (XLU reduction path, C < 512).
    B2, C2, T2 = 13, 256, 2
    k4, k5, k6 = jax.random.split(jax.random.PRNGKey(1), 3)
    student2 = jax.random.normal(k4, (B2, C2), dtype=jnp.float32).astype(jnp.bfloat16)
    teachers2 = jax.random.normal(k5, (T2, B2, C2), dtype=jnp.float32).astype(jnp.bfloat16)
    labels2 = jax.random.randint(k6, (B2,), 0, C2, dtype=jnp.int32)
    check(student2, teachers2, labels2, tol=1e-3)

    # Case 3: bf16 ingest with C >= 512 -> exercises the MXU row-sum path used for
    # the cosine-similarity reductions (bf16 products, f32 accumulation).
    B3, C3, T3 = 16, 512, 2
    k7, k8, k9 = jax.random.split(jax.random.PRNGKey(2), 3)
    student3 = jax.random.normal(k7, (B3, C3), dtype=jnp.float32).astype(jnp.bfloat16)
    teachers3 = jax.random.normal(k8, (T3, B3, C3), dtype=jnp.float32).astype(jnp.bfloat16)
    labels3 = jax.random.randint(k9, (B3,), 0, C3, dtype=jnp.int32)
    check(student3, teachers3, labels3, tol=5e-3)

    print("KERNEL_OK")
</pallas_src>

<mosaic_0001>
module attributes {stable_mosaic.version = 11 : i64} {
  func.func @_kd_kernel(%arg0: i32, %arg1: i32, %arg2: memref<1x1xf32, #tpu.memory_space<smem>>, %arg3: memref<8x32xf32, #tpu.memory_space<vmem>>, %arg4: memref<3x8x32xf32, #tpu.memory_space<vmem>>, %arg5: memref<8x1xi32, #tpu.memory_space<vmem>>, %arg6: memref<1x1x128xf32, #tpu.memory_space<vmem>>, %arg7: memref<3x8x32xf32, #tpu.memory_space<vmem>>) attributes {dimension_semantics = [#tpu.dimension_semantics<parallel>, #tpu.dimension_semantics<arbitrary>], iteration_bounds = array<i64: 1, 1>, scalar_prefetch = 0 : i64, scratch_operands = 1 : i64, tpu.core_type = #tpu.core_type<tc>, window_params = [{transform_indices = @transform_0, window_bounds = array<i64: 1, 1>}, {transform_indices = @transform_1, window_bounds = array<i64: 8, 32>}, {transform_indices = @transform_2, window_bounds = array<i64: 3, 8, 32>}, {transform_indices = @transform_3, window_bounds = array<i64: 8, 1>}, {transform_indices = @transform_4, window_bounds = array<i64: 1, 1, 128>}]} {
    %c0_i32 = arith.constant 0 : i32
    %0 = arith.cmpi eq, %arg1, %c0_i32 : i32
    %1 = arith.extui %0 : i1 to i32
    %c0_i32_0 = arith.constant 0 : i32
    %2 = arith.cmpi ne, %1, %c0_i32_0 : i32
    scf.if %2 {
      %cst_75 = arith.constant 0.000000e+00 : f32
      %213 = vector.broadcast %cst_75 : f32 to vector<1x1x128xf32>
      %c0_76 = arith.constant 0 : index
      %c0_77 = arith.constant 0 : index
      %c0_78 = arith.constant 0 : index
      %214 = vector.load %arg6[%c0_76, %c0_77, %c0_78] : memref<1x1x128xf32, #tpu.memory_space<vmem>>, vector<1x1x128xf32>
      tpu.vector_store %arg6[%c0_76, %c0_77, %c0_78], %213 {strides = array<i32>} : memref<1x1x128xf32, #tpu.memory_space<vmem>>, vector<1x1x128xf32>,
    } else {
    }
    %c0 = arith.constant 0 : index
    %c0_1 = arith.constant 0 : index
    %3 = memref.load %arg2[%c0, %c0_1] : memref<1x1xf32, #tpu.memory_space<smem>>
    %c0_2 = arith.constant 0 : index
    %c0_3 = arith.constant 0 : index
    %4 = vector.load %arg3[%c0_2, %c0_3] : memref<8x32xf32, #tpu.memory_space<vmem>>, vector<8x32xf32>
    %c1_i32 = arith.constant 1 : i32
    %5 = arith.muli %arg0, %c1_i32 : i32
    %6 = arith.addi %5, %arg1 : i32
    %c8_i32 = arith.constant 8 : i32
    %7 = arith.muli %6, %c8_i32 : i32
    %8 = tpu.iota {dimensions = array<i32: 0>} : vector<8x1xi32>
    %9 = vector.broadcast %7 : i32 to vector<8x1xi32>
    %10 = arith.addi %9, %8 : vector<8x1xi32>
    %c8_i32_4 = arith.constant 8 : i32
    %11 = vector.broadcast %c8_i32_4 : i32 to vector<8x1xi32>
    %12 = arith.cmpi slt, %10, %11 : vector<8x1xi32>
    %13 = arith.extui %12 : vector<8x1xi1> to vector<8x1xi32>
    %14 = arith.sitofp %13 : vector<8x1xi32> to vector<8x1xf32>
    %15 = arith.mulf %4, %4 : vector<8x32xf32>
    %cst = arith.constant dense<0.000000e+00> : vector<8xf32>
    %16 = vector.multi_reduction <add>, %15, %cst [1] : vector<8x32xf32> to vector<8xf32>
    %17 = vector.shape_cast %16 : vector<8xf32> to vector<8x1xf32>
    %c0_5 = arith.constant 0 : index
    %c0_6 = arith.constant 0 : index
    %c0_7 = arith.constant 0 : index
    %18 = vector.load %arg4[%c0_5, %c0_6, %c0_7] : memref<3x8x32xf32, #tpu.memory_space<vmem>>, vector<1x8x32xf32>
    %19 = vector.shape_cast %18 : vector<1x8x32xf32> to vector<8x32xf32>
    %c0_8 = arith.constant 0 : index
    %c0_9 = arith.constant 0 : index
    %c0_10 = arith.constant 0 : index
    %20 = vector.load %arg7[%c0_8, %c0_9, %c0_10] : memref<3x8x32xf32, #tpu.memory_space<vmem>>, vector<1x8x32xf32>
    %21 = vector.shape_cast %20 : vector<1x8x32xf32> to vector<8x32xf32>
    %22 = vector.shape_cast %19 : vector<8x32xf32> to vector<1x8x32xf32>
    tpu.vector_store %arg7[%c0_8, %c0_9, %c0_10], %22 {strides = array<i32>} : memref<3x8x32xf32, #tpu.memory_space<vmem>>, vector<1x8x32xf32>,
    %23 = arith.mulf %4, %19 : vector<8x32xf32>
    %cst_11 = arith.constant dense<0.000000e+00> : vector<8xf32>
    %24 = vector.multi_reduction <add>, %23, %cst_11 [1] : vector<8x32xf32> to vector<8xf32>
    %25 = vector.shape_cast %24 : vector<8xf32> to vector<8x1xf32>
    %26 = arith.mulf %19, %19 : vector<8x32xf32>
    %cst_12 = arith.constant dense<0.000000e+00> : vector<8xf32>
    %27 = vector.multi_reduction <add>, %26, %cst_12 [1] : vector<8x32xf32> to vector<8xf32>
    %28 = vector.shape_cast %27 : vector<8xf32> to vector<8x1xf32>
    %29 = arith.mulf %17, %28 : vector<8x1xf32>
    %cst_13 = arith.constant 1.000000e-16 : f32
    %30 = vector.broadcast %cst_13 : f32 to vector<8x1xf32>
    %31 = arith.maximumf %29, %30 : vector<8x1xf32>
    %32 = math.rsqrt %31 : vector<8x1xf32>
    %33 = arith.mulf %25, %32 : vector<8x1xf32>
    %34 = vector.broadcast %3 : f32 to vector<8x1xf32>
    %35 = arith.mulf %33, %34 : vector<8x1xf32>
    %c1 = arith.constant 1 : index
    %c0_14 = arith.constant 0 : index
    %c0_15 = arith.constant 0 : index
    %36 = vector.load %arg4[%c1, %c0_14, %c0_15] : memref<3x8x32xf32, #tpu.memory_space<vmem>>, vector<1x8x32xf32>
    %37 = vector.shape_cast %36 : vector<1x8x32xf32> to vector<8x32xf32>
    %c1_16 = arith.constant 1 : index
    %c0_17 = arith.constant 0 : index
    %c0_18 = arith.constant 0 : index
    %38 = vector.load %arg7[%c1_16, %c0_17, %c0_18] : memref<3x8x32xf32, #tpu.memory_space<vmem>>, vector<1x8x32xf32>
    %39 = vector.shape_cast %38 : vector<1x8x32xf32> to vector<8x32xf32>
    %40 = vector.shape_cast %37 : vector<8x32xf32> to vector<1x8x32xf32>
    tpu.vector_store %arg7[%c1_16, %c0_17, %c0_18], %40 {strides = array<i32>} : memref<3x8x32xf32, #tpu.memory_space<vmem>>, vector<1x8x32xf32>,
    %41 = arith.mulf %4, %37 : vector<8x32xf32>
    %cst_19 = arith.constant dense<0.000000e+00> : vector<8xf32>
    %42 = vector.multi_reduction <add>, %41, %cst_19 [1] : vector<8x32xf32> to vector<8xf32>
    %43 = vector.shape_cast %42 : vector<8xf32> to vector<8x1xf32>
    %44 = arith.mulf %37, %37 : vector<8x32xf32>
    %cst_20 = arith.constant dense<0.000000e+00> : vector<8xf32>
    %45 = vector.multi_reduction <add>, %44, %cst_20 [1] : vector<8x32xf32> to vector<8xf32>
    %46 = vector.shape_cast %45 : vector<8xf32> to vector<8x1xf32>
    %47 = arith.mulf %17, %46 : vector<8x1xf32>
    %cst_21 = arith.constant 1.000000e-16 : f32
    %48 = vector.broadcast %cst_21 : f32 to vector<8x1xf32>
    %49 = arith.maximumf %47, %48 : vector<8x1xf32>
    %50 = math.rsqrt %49 : vector<8x1xf32>
    %51 = arith.mulf %43, %50 : vector<8x1xf32>
    %52 = vector.broadcast %3 : f32 to vector<8x1xf32>
    %53 = arith.mulf %51, %52 : vector<8x1xf32>
    %c2 = arith.constant 2 : index
    %c0_22 = arith.constant 0 : index
    %c0_23 = arith.constant 0 : index
    %54 = vector.load %arg4[%c2, %c0_22, %c0_23] : memref<3x8x32xf32, #tpu.memory_space<vmem>>, vector<1x8x32xf32>
    %55 = vector.shape_cast %54 : vector<1x8x32xf32> to vector<8x32xf32>
    %c2_24 = arith.constant 2 : index
    %c0_25 = arith.constant 0 : index
    %c0_26 = arith.constant 0 : index
    %56 = vector.load %arg7[%c2_24, %c0_25, %c0_26] : memref<3x8x32xf32, #tpu.memory_space<vmem>>, vector<1x8x32xf32>
    %57 = vector.shape_cast %56 : vector<1x8x32xf32> to vector<8x32xf32>
    %58 = vector.shape_cast %55 : vector<8x32xf32> to vector<1x8x32xf32>
    tpu.vector_store %arg7[%c2_24, %c0_25, %c0_26], %58 {strides = array<i32>} : memref<3x8x32xf32, #tpu.memory_space<vmem>>, vector<1x8x32xf32>,
    %59 = arith.mulf %4, %55 : vector<8x32xf32>
    %cst_27 = arith.constant dense<0.000000e+00> : vector<8xf32>
    %60 = vector.multi_reduction <add>, %59, %cst_27 [1] : vector<8x32xf32> to vector<8xf32>
    %61 = vector.shape_cast %60 : vector<8xf32> to vector<8x1xf32>
    %62 = arith.mulf %55, %55 : vector<8x32xf32>
    %cst_28 = arith.constant dense<0.000000e+00> : vector<8xf32>
    %63 = vector.multi_reduction <add>, %62, %cst_28 [1] : vector<8x32xf32> to vector<8xf32>
    %64 = vector.shape_cast %63 : vector<8xf32> to vector<8x1xf32>
    %65 = arith.mulf %17, %64 : vector<8x1xf32>
    %cst_29 = arith.constant 1.000000e-16 : f32
    %66 = vector.broadcast %cst_29 : f32 to vector<8x1xf32>
    %67 = arith.maximumf %65, %66 : vector<8x1xf32>
    %68 = math.rsqrt %67 : vector<8x1xf32>
    %69 = arith.mulf %61, %68 : vector<8x1xf32>
    %70 = vector.broadcast %3 : f32 to vector<8x1xf32>
    %71 = arith.mulf %69, %70 : vector<8x1xf32>
    %72 = arith.maximumf %35, %53 : vector<8x1xf32>
    %73 = arith.maximumf %72, %71 : vector<8x1xf32>
    %74 = arith.subf %35, %73 : vector<8x1xf32>
    %75 = math.exp %74 : vector<8x1xf32>
    %76 = arith.subf %53, %73 : vector<8x1xf32>
    %77 = math.exp %76 : vector<8x1xf32>
    %78 = arith.subf %71, %73 : vector<8x1xf32>
    %79 = math.exp %78 : vector<8x1xf32>
    %80 = arith.addf %75, %77 : vector<8x1xf32>
    %81 = arith.addf %80, %79 : vector<8x1xf32>
    %82 = tpu.reciprocal %81 : vector<8x1xf32> -> vector<8x1xf32>
    %83 = arith.mulf %75, %82 : vector<8x1xf32>
    %84 = arith.mulf %77, %82 : vector<8x1xf32>
    %85 = arith.mulf %79, %82 : vector<8x1xf32>
    %cst_30 = arith.constant 2.500000e-01 : f32
    %86 = vector.broadcast %cst_30 : f32 to vector<8x1xf32>
    %87 = arith.mulf %83, %86 : vector<8x1xf32>
    %c0_31 = arith.constant 0 : index
    %c0_32 = arith.constant 0 : index
    %c0_33 = arith.constant 0 : index
    %88 = vector.load %arg7[%c0_31, %c0_32, %c0_33] : memref<3x8x32xf32, #tpu.memory_space<vmem>>, vector<1x8x32xf32>
    %89 = vector.shape_cast %88 : vector<1x8x32xf32> to vector<8x32xf32>
    %90 = vector.broadcast %87 : vector<8x1xf32> to vector<8x32xf32>
    %91 = arith.mulf %90, %89 : vector<8x32xf32>
    %cst_34 = arith.constant 2.500000e-01 : f32
    %92 = vector.broadcast %cst_34 : f32 to vector<8x1xf32>
    %93 = arith.mulf %84, %92 : vector<8x1xf32>
    %c1_35 = arith.constant 1 : index
    %c0_36 = arith.constant 0 : index
    %c0_37 = arith.constant 0 : index
    %94 = vector.load %arg7[%c1_35, %c0_36, %c0_37] : memref<3x8x32xf32, #tpu.memory_space<vmem>>, vector<1x8x32xf32>
    %95 = vector.shape_cast %94 : vector<1x8x32xf32> to vector<8x32xf32>
    %96 = vector.broadcast %93 : vector<8x1xf32> to vector<8x32xf32>
    %97 = arith.mulf %96, %95 : vector<8x32xf32>
    %98 = arith.addf %91, %97 : vector<8x32xf32>
    %cst_38 = arith.constant 2.500000e-01 : f32
    %99 = vector.broadcast %cst_38 : f32 to vector<8x1xf32>
    %100 = arith.mulf %85, %99 : vector<8x1xf32>
    %c2_39 = arith.constant 2 : index
    %c0_40 = arith.constant 0 : index
    %c0_41 = arith.constant 0 : index
    %101 = vector.load %arg7[%c2_39, %c0_40, %c0_41] : memref<3x8x32xf32, #tpu.memory_space<vmem>>, vector<1x8x32xf32>
    %102 = vector.shape_cast %101 : vector<1x8x32xf32> to vector<8x32xf32>
    %103 = vector.broadcast %100 : vector<8x1xf32> to vector<8x32xf32>
    %104 = arith.mulf %103, %102 : vector<8x32xf32>
    %105 = arith.addf %98, %104 : vector<8x32xf32>
    %cst_42 = arith.constant dense<0xFF800000> : vector<8xf32>
    %106 = vector.multi_reduction <maximumf>, %4, %cst_42 [1] : vector<8x32xf32> to vector<8xf32>
    %107 = vector.shape_cast %106 : vector<8xf32> to vector<8x1xf32>
    %108 = vector.broadcast %107 : vector<8x1xf32> to vector<8x32xf32>
    %109 = arith.subf %4, %108 : vector<8x32xf32>
    %cst_43 = arith.constant 2.500000e-01 : f32
    %110 = vector.broadcast %cst_43 : f32 to vector<8x32xf32>
    %111 = arith.mulf %109, %110 : vector<8x32xf32>
    %112 = math.exp %111 : vector<8x32xf32>
    %cst_44 = arith.constant dense<0.000000e+00> : vector<8xf32>
    %113 = vector.multi_reduction <add>, %112, %cst_44 [1] : vector<8x32xf32> to vector<8xf32>
    %114 = vector.shape_cast %113 : vector<8xf32> to vector<8x1xf32>
    %115 = math.exp %109 : vector<8x32xf32>
    %cst_45 = arith.constant dense<0.000000e+00> : vector<8xf32>
    %116 = vector.multi_reduction <add>, %115, %cst_45 [1] : vector<8x32xf32> to vector<8xf32>
    %117 = vector.shape_cast %116 : vector<8xf32> to vector<8x1xf32>
    %cst_46 = arith.constant dense<0xFF800000> : vector<8xf32>
    %118 = vector.multi_reduction <maximumf>, %105, %cst_46 [1] : vector<8x32xf32> to vector<8xf32>
    %119 = vector.shape_cast %118 : vector<8xf32> to vector<8x1xf32>
    %120 = vector.broadcast %119 : vector<8x1xf32> to vector<8x32xf32>
    %121 = arith.subf %105, %120 : vector<8x32xf32>
    %122 = math.exp %121 : vector<8x32xf32>
    %cst_47 = arith.constant dense<0.000000e+00> : vector<8xf32>
    %123 = vector.multi_reduction <add>, %122, %cst_47 [1] : vector<8x32xf32> to vector<8xf32>
    %124 = vector.shape_cast %123 : vector<8xf32> to vector<8x1xf32>
    %125 = arith.subf %121, %111 : vector<8x32xf32>
    %126 = arith.mulf %122, %125 : vector<8x32xf32>
    %cst_48 = arith.constant dense<0.000000e+00> : vector<8xf32>
    %127 = vector.multi_reduction <add>, %126, %cst_48 [1] : vector<8x32xf32> to vector<8xf32>
    %128 = vector.shape_cast %127 : vector<8xf32> to vector<8x1xf32>
    %129 = tpu.reciprocal %124 : vector<8x1xf32> -> vector<8x1xf32>
    %130 = arith.mulf %128, %129 : vector<8x1xf32>
    %131 = math.log %114 : vector<8x1xf32>
    %132 = arith.addf %130, %131 : vector<8x1xf32>
    %133 = math.log %124 : vector<8x1xf32>
    %134 = arith.subf %132, %133 : vector<8x1xf32>
    %135 = tpu.iota {dimensions = array<i32: 1>} : vector<8x32xi32>
    %c0_49 = arith.constant 0 : index
    %c0_50 = arith.constant 0 : index
    %136 = vector.load %arg5[%c0_49, %c0_50] : memref<8x1xi32, #tpu.memory_space<vmem>>, vector<8x1xi32>
    %137 = vector.broadcast %136 : vector<8x1xi32> to vector<8x32xi32>
    %138 = arith.cmpi eq, %135, %137 : vector<8x32xi32>
    %cst_51 = arith.constant 0.000000e+00 : f32
    %139 = vector.broadcast %cst_51 : f32 to vector<8x32xf32>
    %140 = arith.select %138, %4, %139 : vector<8x32xi1>, vector<8x32xf32>
    %cst_52 = arith.constant dense<0.000000e+00> : vector<8xf32>
    %141 = vector.multi_reduction <add>, %140, %cst_52 [1] : vector<8x32xf32> to vector<8xf32>
    %142 = vector.shape_cast %141 : vector<8xf32> to vector<8x1xf32>
    %cst_53 = arith.constant dense<0.000000e+00> : vector<8xf32>
    %143 = vector.multi_reduction <add>, %4, %cst_53 [1] : vector<8x32xf32> to vector<8xf32>
    %144 = vector.shape_cast %143 : vector<8xf32> to vector<8x1xf32>
    %cst_54 = arith.constant 0.899999976 : f32
    %145 = vector.broadcast %cst_54 : f32 to vector<8x1xf32>
    %146 = arith.mulf %145, %142 : vector<8x1xf32>
    %cst_55 = arith.constant 3.125000e-03 : f32
    %147 = vector.broadcast %cst_55 : f32 to vector<8x1xf32>
    %148 = arith.mulf %147, %144 : vector<8x1xf32>
    %149 = arith.addf %146, %148 : vector<8x1xf32>
    %cst_56 = arith.constant 0.000000e+00 : f32
    %150 = vector.broadcast %cst_56 : f32 to vector<8x1xf32>
    %151 = arith.subf %150, %149 : vector<8x1xf32>
    %152 = arith.addf %151, %107 : vector<8x1xf32>
    %153 = math.log %117 : vector<8x1xf32>
    %154 = arith.addf %152, %153 : vector<8x1xf32>
    %155 = arith.mulf %14, %134 : vector<8x1xf32>
    %cst_57 = arith.constant dense<0.000000e+00> : vector<1xf32>
    %156 = vector.multi_reduction <add>, %155, %cst_57 [0] : vector<8x1xf32> to vector<1xf32>
    %157 = vector.shape_cast %156 : vector<1xf32> to vector<1x1xf32>
    %158 = arith.mulf %14, %154 : vector<8x1xf32>
    %cst_58 = arith.constant dense<0.000000e+00> : vector<1xf32>
    %159 = vector.multi_reduction <add>, %158, %cst_58 [0] : vector<8x1xf32> to vector<1xf32>
    %160 = vector.shape_cast %159 : vector<1xf32> to vector<1x1xf32>
    %161 = tpu.iota {dimensions = array<i32: 2>} : vector<1x1x128xi32>
    %c0_i32_59 = arith.constant 0 : i32
    %162 = vector.broadcast %c0_i32_59 : i32 to vector<1x1x128xi32>
    %163 = arith.cmpi eq, %161, %162 : vector<1x1x128xi32>
    %164 = vector.shape_cast %157 : vector<1x1xf32> to vector<1x1x1xf32>
    %cst_60 = arith.constant 0.000000e+00 : f32
    %165 = vector.shape_cast %164 : vector<1x1x1xf32> to vector<1x1x1xf32>
    %166 = vector.broadcast %165 : vector<1x1x1xf32> to vector<1x1x128xf32>
    %167 = vector.broadcast %cst_60 : f32 to vector<1x1x128xf32>
    %168 = arith.select %163, %166, %167 : vector<1x1x128xi1>, vector<1x1x128xf32>
    %c1_i32_61 = arith.constant 1 : i32
    %169 = vector.broadcast %c1_i32_61 : i32 to vector<1x1x128xi32>
    %170 = arith.cmpi eq, %161, %169 : vector<1x1x128xi32>
    %171 = vector.shape_cast %160 : vector<1x1xf32> to vector<1x1x1xf32>
    %cst_62 = arith.constant 0.000000e+00 : f32
    %172 = vector.shape_cast %171 : vector<1x1x1xf32> to vector<1x1x1xf32>
    %173 = vector.broadcast %172 : vector<1x1x1xf32> to vector<1x1x128xf32>
    %174 = vector.broadcast %cst_62 : f32 to vector<1x1x128xf32>
    %175 = arith.select %170, %173, %174 : vector<1x1x128xi1>, vector<1x1x128xf32>
    %176 = arith.addf %168, %175 : vector<1x1x128xf32>
    %177 = arith.mulf %14, %83 : vector<8x1xf32>
    %cst_63 = arith.constant dense<0.000000e+00> : vector<1xf32>
    %178 = vector.multi_reduction <add>, %177, %cst_63 [0] : vector<8x1xf32> to vector<1xf32>
    %179 = vector.shape_cast %178 : vector<1xf32> to vector<1x1xf32>
    %c2_i32 = arith.constant 2 : i32
    %180 = vector.broadcast %c2_i32 : i32 to vector<1x1x128xi32>
    %181 = arith.cmpi eq, %161, %180 : vector<1x1x128xi32>
    %182 = vector.shape_cast %179 : vector<1x1xf32> to vector<1x1x1xf32>
    %cst_64 = arith.constant 0.000000e+00 : f32
    %183 = vector.shape_cast %182 : vector<1x1x1xf32> to vector<1x1x1xf32>
    %184 = vector.broadcast %183 : vector<1x1x1xf32> to vector<1x1x128xf32>
    %185 = vector.broadcast %cst_64 : f32 to vector<1x1x128xf32>
    %186 = arith.select %181, %184, %185 : vector<1x1x128xi1>, vector<1x1x128xf32>
    %187 = arith.addf %176, %186 : vector<1x1x128xf32>
    %188 = arith.mulf %14, %84 : vector<8x1xf32>
    %cst_65 = arith.constant dense<0.000000e+00> : vector<1xf32>
    %189 = vector.multi_reduction <add>, %188, %cst_65 [0] : vector<8x1xf32> to vector<1xf32>
    %190 = vector.shape_cast %189 : vector<1xf32> to vector<1x1xf32>
    %c3_i32 = arith.constant 3 : i32
    %191 = vector.broadcast %c3_i32 : i32 to vector<1x1x128xi32>
    %192 = arith.cmpi eq, %161, %191 : vector<1x1x128xi32>
    %193 = vector.shape_cast %190 : vector<1x1xf32> to vector<1x1x1xf32>
    %cst_66 = arith.constant 0.000000e+00 : f32
    %194 = vector.shape_cast %193 : vector<1x1x1xf32> to vector<1x1x1xf32>
    %195 = vector.broadcast %194 : vector<1x1x1xf32> to vector<1x1x128xf32>
    %196 = vector.broadcast %cst_66 : f32 to vector<1x1x128xf32>
    %197 = arith.select %192, %195, %196 : vector<1x1x128xi1>, vector<1x1x128xf32>
    %198 = arith.addf %187, %197 : vector<1x1x128xf32>
    %199 = arith.mulf %14, %85 : vector<8x1xf32>
    %cst_67 = arith.constant dense<0.000000e+00> : vector<1xf32>
    %200 = vector.multi_reduction <add>, %199, %cst_67 [0] : vector<8x1xf32> to vector<1xf32>
    %201 = vector.shape_cast %200 : vector<1xf32> to vector<1x1xf32>
    %c4_i32 = arith.constant 4 : i32
    %202 = vector.broadcast %c4_i32 : i32 to vector<1x1x128xi32>
    %203 = arith.cmpi eq, %161, %202 : vector<1x1x128xi32>
    %204 = vector.shape_cast %201 : vector<1x1xf32> to vector<1x1x1xf32>
    %cst_68 = arith.constant 0.000000e+00 : f32
    %205 = vector.shape_cast %204 : vector<1x1x1xf32> to vector<1x1x1xf32>
    %206 = vector.broadcast %205 : vector<1x1x1xf32> to vector<1x1x128xf32>
    %207 = vector.broadcast %cst_68 : f32 to vector<1x1x128xf32>
    %208 = arith.select %203, %206, %207 : vector<1x1x128xi1>, vector<1x1x128xf32>
    %209 = arith.addf %198, %208 : vector<1x1x128xf32>
    %c0_69 = arith.constant 0 : index
    %c0_70 = arith.constant 0 : index
    %c0_71 = arith.constant 0 : index
    %210 = vector.load %arg6[%c0_69, %c0_70, %c0_71] : memref<1x1x128xf32, #tpu.memory_space<vmem>>, vector<1x1x128xf32>
    %211 = arith.addf %210, %209 : vector<1x1x128xf32>
    %c0_72 = arith.constant 0 : index
    %c0_73 = arith.constant 0 : index
    %c0_74 = arith.constant 0 : index
    %212 = vector.load %arg6[%c0_72, %c0_73, %c0_74] : memref<1x1x128xf32, #tpu.memory_space<vmem>>, vector<1x1x128xf32>
    tpu.vector_store %arg6[%c0_72, %c0_73, %c0_74], %211 {strides = array<i32>} : memref<1x1x128xf32, #tpu.memory_space<vmem>>, vector<1x1x128xf32>,
    return
  }
  func.func @transform_0(%arg0: i32, %arg1: i32) -> (i32, i32) {
    %c0_i32 = arith.constant 0 : i32
    %c0_i32_0 = arith.constant 0 : i32
    %c0_i32_1 = arith.constant 0 : i32
    return %c0_i32, %c0_i32_0 : i32, i32
  }
  func.func @transform_1(%arg0: i32, %arg1: i32) -> (i32, i32) {
    %c1_i32 = arith.constant 1 : i32
    %0 = arith.muli %arg0, %c1_i32 : i32
    %1 = arith.addi %0, %arg1 : i32
    %c0_i32 = arith.constant 0 : i32
    %c0_i32_0 = arith.constant 0 : i32
    return %1, %c0_i32 : i32, i32
  }
  func.func @transform_2(%arg0: i32, %arg1: i32) -> (i32, i32, i32) {
    %c1_i32 = arith.constant 1 : i32
    %0 = arith.muli %arg0, %c1_i32 : i32
    %1 = arith.addi %0, %arg1 : i32
    %c0_i32 = arith.constant 0 : i32
    %c0_i32_0 = arith.constant 0 : i32
    %c0_i32_1 = arith.constant 0 : i32
    return %c0_i32, %1, %c0_i32_0 : i32, i32, i32
  }
  func.func @transform_3(%arg0: i32, %arg1: i32) -> (i32, i32) {
    %c1_i32 = arith.constant 1 : i32
    %0 = arith.muli %arg0, %c1_i32 : i32
    %1 = arith.addi %0, %arg1 : i32
    %c0_i32 = arith.constant 0 : i32
    %c0_i32_0 = arith.constant 0 : i32
    return %1, %c0_i32 : i32, i32
  }
  func.func @transform_4(%arg0: i32, %arg1: i32) -> (i32, i32, i32) {
    %c0_i32 = arith.constant 0 : i32
    %c0_i32_0 = arith.constant 0 : i32
    %c0_i32_1 = arith.constant 0 : i32
    return %arg0, %c0_i32, %c0_i32_0 : i32, i32, i32
  }
}

</mosaic_0001>

<llo_original>
// kernel: tpu_custom_call.1
$region0: #{tpu_custom_call.1}
  #allocation0 [shape = 'u32[]', space=smem, size = 0x4, offset = 0x4, fixed_abs, tag = 'smem constant byte address 0x4 - core index']
  #allocation1 [shape = 'u32[72,128]{1,0:T(1,128)}', space=vmem, size = 0x9000, scoped, tag = 'internal scratch']
  #allocation2 [shape = 'f32[3,8,32]{2,1,0:T(8,128)}', space=vmem, size = 0x3000, scoped, tag = 'scratch operand']
  #allocation3 [shape = 'f32[1,1]{1,0:T(1,128)S(6)}', space=smem, size = 0x200, scoped, tag = 'scoped memory for tpu_custom_call.1']
  %s0 = inlined_call_operand.<no memory space> [shape: f32[1,1], index: 0, kind: input, shape index: {}]
  %s1 = inlined_call_operand.vmem [shape: f32[8,32], index: 1, kind: input, shape index: {}]
  %s2 = inlined_call_operand.hbm [shape: f32[3,8,32], index: 2, kind: input, shape index: {}]
  %s3 = inlined_call_operand.vmem [shape: s32[8,1], index: 3, kind: input, shape index: {}]
  %s4 = inlined_call_operand.hbm [shape: f32[1,1,128], index: 4, kind: output, shape index: {}]
  %s5 = sld [smem:[#allocation0]]
  $region34: #{tpu_custom_call.1} parent=0
    _
  %s7 = ssub.s32 1, %s5
  %s8 = scalar_select 0, %s7, %s5
  %9 = sst [smem:[#allocation3]] %s0
  $region1: #{tpu_custom_call.1} parent=0
    #allocation4 [shape = 'u8[12288]{0}', space=vmem, size = 0x3000, scoped, tag = 'input window, operand 2, single buffered']
    #allocation5 [shape = 's32[1]{0}', space=sflag, size = 0x4, scoped, tag = 'scoped memory for tpu_custom_call.1']
    #allocation6 [shape = 's32[1]{0}', space=sflag, size = 0x4, scoped, tag = 'scoped memory for tpu_custom_call.1']
    #allocation7 [shape = 'u8[512]{0}', space=vmem, size = 0x400, scoped, tag = 'output window, operand 0, single buffered']
    %10 = vsyncpa [#allocation5], 0
    %11 = vsyncpa [#allocation6], 0
    // Predicated region
    $region2: #{tpu_custom_call.1} parent=1 // pred_check
      _
    $region3: #{tpu_custom_call.1} parent=1 // pred_check_branch
      %13 = sbr.rel (0) target = $region5
    $region4: #{tpu_custom_call.1} parent=1 // pred_region
      _
    $region5: #{tpu_custom_call.1} parent=1 // pred_fallthru
      _
    // Predicated region
    $region6: #{tpu_custom_call.1} parent=1 // pred_check
      _
    $region7: #{tpu_custom_call.1} parent=1 // pred_check_branch
      %15 = sbr.rel (0) target = $region9
    $region8: #{tpu_custom_call.1} parent=1 // pred_region
      %s16 = sadd.s32 0, 0
      %p17 = scmp.lt.s32.totalorder %s16, 0
      %s18 = scalar_select %p17, %s16, 0
      %s19 = smul.addr %s18, 8
      %s20 = scalar_lea.vmem %s1, %s19
      %s21 = sadd.s32 0, 0
    $region9: #{tpu_custom_call.1} parent=1 // pred_fallthru
      _
    // Predicated region
    $region10: #{tpu_custom_call.1} parent=1 // pred_check
      _
    $region11: #{tpu_custom_call.1} parent=1 // pred_check_branch
      %23 = sbr.rel (0) target = $region13
    $region12: #{tpu_custom_call.1} parent=1 // pred_region
      %s24 = sadd.s32 0, 0
      %26 = vsyncadd [#allocation5], 0
      %s27 = smul.addr %s24, 8
      %s28 = scalar_lea.hbm %s2, %s27
      %s29 = sshll.u32 %s28, 4
      %s30 = int_to_ptr.hbm [resolvable:$true] %s29
      %s31 = sshll.u32 [#allocation4], 4
      %s32 = int_to_ptr.vmem [resolvable:$true] %s31
      %37 = dma.hbm_to_vmem [thread:$0]  %s30, 384, %s32, [#allocation5], 128, 128, 8
    $region13: #{tpu_custom_call.1} parent=1 // pred_fallthru
      _
    // Predicated region
    $region14: #{tpu_custom_call.1} parent=1 // pred_check
      _
    $region15: #{tpu_custom_call.1} parent=1 // pred_check_branch
      %39 = sbr.rel (0) target = $region17
    $region16: #{tpu_custom_call.1} parent=1 // pred_region
      %s40 = sadd.s32 0, 0
      %p41 = scmp.lt.s32.totalorder %s40, 0
      %s42 = scalar_select %p41, %s40, 0
      %s43 = smul.addr %s42, 8
      %s44 = scalar_lea.vmem %s3, %s43
      %s45 = sadd.s32 0, 0
    $region17: #{tpu_custom_call.1} parent=1 // pred_fallthru
      _
    // Predicated region
    $region18: #{tpu_custom_call.1} parent=1 // pred_check
      _
    $region19: #{tpu_custom_call.1} parent=1 // pred_check_branch
      %47 = sbr.rel (0) target = $region21
    $region20: #{tpu_custom_call.1} parent=1 // pred_region
      %49 = dma.done [#allocation5], 384
    $region21: #{tpu_custom_call.1} parent=1 // pred_fallthru
      _
    %s50 = sadd.s32 0, 0
    %p51 = scmp.lt.s32.totalorder %s50, 0
    %s52 = scalar_select %p51, %s50, 0
    %s53 = smul.addr %s52, 8
    %s54 = scalar_lea.vmem %s1, %s53
    %s55 = sadd.s32 0, 0
    %p56 = scmp.lt.s32.totalorder %s55, 0
    %s57 = scalar_select %p56, %s55, 0
    %s58 = smul.addr %s57, 8
    %s59 = scalar_lea.vmem %s3, %s58
    %s60 = sadd.s32 0, 0
    %p61 = scmp.lt.s32.totalorder %s60, 0
    %s62 = scalar_select %p61, %s60, 0
    %s63 = smul.addr %s62, 8
    %s64 = scalar_lea.vmem %s1, %s63
    %s65 = sadd.s32 0, 0
    %s66 = sadd.s32 0, 0
    %s67 = sadd.s32 0, 0
    %p68 = scmp.lt.s32.totalorder %s67, 0
    %s69 = scalar_select %p68, %s67, 0
    %s70 = smul.addr %s69, 8
    %s71 = scalar_lea.vmem %s3, %s70
    %s72 = sadd.s32 0, 0
    %p73 = scmp.eq.s32.totalorder 0, 0
    // Predicated region
    $region22: #{tpu_custom_call.1} parent=1 // pred_check
      %p74 = pneg %p73
    $region23: #{tpu_custom_call.1} parent=1 // pred_check_branch
      %76 = sbr.rel (%p74) target = $region25
    $region24: #{tpu_custom_call.1} parent=1 // pred_region
      %77 = vst [vmem:[#allocation7] sm:$0x1] 0.0
    $region25: #{tpu_custom_call.1} parent=1 // pred_fallthru
      _
    %s78 = sld [smem:[#allocation3]]
    %v79 = vld [vmem:[%s64] sm:$0xff]
    %s80 = sadd.s32 0, 0
    %s81 = smul.u32 %s80, 8
    %v82 = vlaneseq
    %v83 = vshrl.u32 %v82, 7
    %v84 = vstv %s81
    %v85 = vadd.s32 %v84, %v83
    %vm86 = vcmp.lt.s32.totalorder %v85, 8
    %v87 = vsel %vm86, 1, 0
    %v88 = vcvt.s32.f32 %v87
    %v89 = vmul.f32 %v79, %v79
    %vm90 = vcmask 261120
    %v91 = vsel %vm90, %v89, 0.0
    %92 = vadd.xlane.f32.xlu0 %v91
    %v93 = vpop.xlane.xlu0 %92
    %v94 = vld [vmem:[#allocation4] sm:$0xff]
    %95 = vst.msk [vmem:[#allocation2] sm:$0xff] %vm90, %v94
    %v96 = vmul.f32 %v79, %v94
    %v97 = vsel %vm90, %v96, 0.0
    %98 = vadd.xlane.f32.xlu0 %v97
    %v99 = vpop.xlane.xlu0 %98
    %v100 = vmul.f32 %v94, %v94
    %v101 = vsel %vm90, %v100, 0.0
    %102 = vadd.xlane.f32.xlu0 %v101
    %v103 = vpop.xlane.xlu0 %102
    %v104 = vmul.f32 %v93, %v103
    %v105 = vmax.f32 %v104, 1e-16
    %v106 = vrsqrt.pop %v105
    %v107 = vmul.f32 %v106, %v105
    %v108 = vmul.f32 %v107, %v106
    %v109 = vmul.f32 0.5, %v108
    %v110 = vsub.f32 1.5, %v109
    %v111 = vmul.f32 %v106, %v110
    %vm112 = vweird.f32 %v105
    %vm113 = vweird.f32 %v106
    %vm114 = vmor %vm112, %vm113
    %v115 = vsel %vm114, %v106, %v111
    %v116 = vmul.f32 %v99, %v115
    %v117 = vstv %s78
    %v118 = vmul.f32 %v116, %v117
    %s119 = scalar_lea.vmem [#allocation4], 8
    %v120 = vld [vmem:[%s119] sm:$0xff]
    %s121 = scalar_lea.vmem [#allocation2], 8
    %122 = vst.msk [vmem:[%s121] sm:$0xff] %vm90, %v120
    %v123 = vmul.f32 %v79, %v120
    %v124 = vsel %vm90, %v123, 0.0
    %125 = vadd.xlane.f32.xlu0 %v124
    %v126 = vpop.xlane.xlu0 %125
    %v127 = vmul.f32 %v120, %v120
    %v128 = vsel %vm90, %v127, 0.0
    %129 = vadd.xlane.f32.xlu0 %v128
    %v130 = vpop.xlane.xlu0 %129
    %v131 = vmul.f32 %v93, %v130
    %v132 = vmax.f32 %v131, 1e-16
    %v133 = vrsqrt.pop %v132
    %v134 = vmul.f32 %v133, %v132
    %v135 = vmul.f32 %v134, %v133
    %v136 = vmul.f32 0.5, %v135
    %v137 = vsub.f32 1.5, %v136
    %v138 = vmul.f32 %v133, %v137
    %vm139 = vweird.f32 %v132
    %vm140 = vweird.f32 %v133
    %vm141 = vmor %vm139, %vm140
    %v142 = vsel %vm141, %v133, %v138
    %v143 = vmul.f32 %v126, %v142
    %v144 = vmul.f32 %v143, %v117
    %s145 = scalar_lea.vmem [#allocation4], 16
    %v146 = vld [vmem:[%s145] sm:$0xff]
    %s147 = scalar_lea.vmem [#allocation2], 16
    %148 = vst.msk [vmem:[%s147] sm:$0xff] %vm90, %v146
    %v149 = vmul.f32 %v79, %v146
    %v150 = vsel %vm90, %v149, 0.0
    %151 = vadd.xlane.f32.xlu0 %v150
    %v152 = vpop.xlane.xlu0 %151
    %v153 = vmul.f32 %v146, %v146
    %v154 = vsel %vm90, %v153, 0.0
    %155 = vadd.xlane.f32.xlu0 %v154
    %v156 = vpop.xlane.xlu0 %155
    %v157 = vmul.f32 %v93, %v156
    %v158 = vmax.f32 %v157, 1e-16
    %v159 = vrsqrt.pop %v158
    %v160 = vmul.f32 %v159, %v158
    %v161 = vmul.f32 %v160, %v159
    %v162 = vmul.f32 0.5, %v161
    %v163 = vsub.f32 1.5, %v162
    %v164 = vmul.f32 %v159, %v163
    %vm165 = vweird.f32 %v158
    %vm166 = vweird.f32 %v159
    %vm167 = vmor %vm165, %vm166
    %v168 = vsel %vm167, %v159, %v164
    %v169 = vmul.f32 %v152, %v168
    %v170 = vmul.f32 %v169, %v117
    %v171 = vmax.f32 %v118, %v144
    %v172 = vmax.f32 %v171, %v170
    %v173 = vsub.f32 %v118, %v172
    %v174 = vmul.f32 %v173, 1.442695
    %v175 = vpow.pop %v174
    %v176 = vsub.f32 %v144, %v172
    %v177 = vmul.f32 %v176, 1.442695
    %v178 = vpow.pop %v177
    %v179 = vsub.f32 %v170, %v172
    %v180 = vmul.f32 %v179, 1.442695
    %v181 = vpow.pop %v180
    %v182 = vadd.f32 %v175, %v178
    %v183 = vadd.f32 %v182, %v181
    %v184 = vrcp.pop %v183
    %v185 = vmul.f32 %v183, %v184
    %v186 = vsub.f32 1.0, %v185
    %v187 = vmul.f32 %v184, %v186
    %v188 = vadd.f32 %v184, %v187
    %vm189 = vweird.f32 %v183
    %vm190 = vweird.f32 %v184
    %vm191 = vmor %vm189, %vm190
    %v192 = vsel %vm191, %v184, %v188
    %v193 = vand.u32 2147483647, %v183
    %vm194 = vcmp.eq.f32.partialorder %v193, 8.507059e+37
    %v195 = vand.u32 %v183, 2147483648
    %v196 = vor.u32 1.1754944e-38, %v195
    %v197 = vsel %vm194, %v196, %v192
    %v198 = vmul.f32 %v175, %v197
    %v199 = vmul.f32 %v178, %v197
    %v200 = vmul.f32 %v181, %v197
    %v201 = vmul.f32 %v198, 0.25
    %v202 = vld [vmem:[#allocation2] sm:$0xff]
    %v203 = vmul.f32 %v201, %v202
    %v204 = vmul.f32 %v199, 0.25
    %v205 = vld [vmem:[%s121] sm:$0xff]
    %v206 = vmul.f32 %v204, %v205
    %v207 = vadd.f32 %v203, %v206
    %v208 = vmul.f32 %v200, 0.25
    %v209 = vld [vmem:[%s147] sm:$0xff]
    %v210 = vmul.f32 %v208, %v209
    %v211 = vadd.f32 %v207, %v210
    %v212 = vsel %vm90, %v79, -inf
    %213 = vmax.xlane.f32.xlu0 %v212
    %v214 = vpop.xlane.xlu0 %213
    %v215 = vsub.f32 %v79, %v214
    %v216 = vmul.f32 %v215, 0.25
    %v217 = vmul.f32 %v216, 1.442695
    %v218 = vpow.pop %v217
    %v219 = vsel %vm90, %v218, 0.0
    %220 = vadd.xlane.f32.xlu0 %v219
    %v221 = vpop.xlane.xlu0 %220
    %v222 = vmul.f32 %v215, 1.442695
    %v223 = vpow.pop %v222
    %v224 = vsel %vm90, %v223, 0.0
    %225 = vadd.xlane.f32.xlu0 %v224
    %v226 = vpop.xlane.xlu0 %225
    %v227 = vsel %vm90, %v211, -inf
    %228 = vmax.xlane.f32.xlu0 %v227
    %v229 = vpop.xlane.xlu0 %228
    %v230 = vsub.f32 %v211, %v229
    %v231 = vmul.f32 %v230, 1.442695
    %v232 = vpow.pop %v231
    %v233 = vsel %vm90, %v232, 0.0
    %234 = vadd.xlane.f32.xlu0 %v233
    %v235 = vpop.xlane.xlu0 %234
    %v236 = vsub.f32 %v230, %v216
    %v237 = vmul.f32 %v232, %v236
    %v238 = vsel %vm90, %v237, 0.0
    %239 = vadd.xlane.f32.xlu0 %v238
    %v240 = vpop.xlane.xlu0 %239
    %v241 = vrcp.pop %v235
    %v242 = vmul.f32 %v235, %v241
    %v243 = vsub.f32 1.0, %v242
    %v244 = vmul.f32 %v241, %v243
    %v245 = vadd.f32 %v241, %v244
    %vm246 = vweird.f32 %v235
    %vm247 = vweird.f32 %v241
    %vm248 = vmor %vm246, %vm247
    %v249 = vsel %vm248, %v241, %v245
    %v250 = vand.u32 2147483647, %v235
    %vm251 = vcmp.eq.f32.partialorder %v250, 8.507059e+37
    %v252 = vand.u32 %v235, 2147483648
    %v253 = vor.u32 1.1754944e-38, %v252
    %v254 = vsel %vm251, %v253, %v249
    %v255 = vmul.f32 %v240, %v254
    %v256 = vlog2.pop %v221
    %v257 = vmul.f32 %v256, 0.6931472
    %v258 = vadd.f32 %v255, %v257
    %v259 = vlog2.pop %v235
    %v260 = vmul.f32 %v259, 0.6931472
    %v261 = vsub.f32 %v258, %v260
    %v262 = vlaneseq
    %v263 = vand.u32 %v262, 127
    %v264 = vld [vmem:[%s71] sm:$0xff]
    %265 = vset.pattern.permute.xlu0 0
    %266 = vperm.xlu0 %265, %v264
    %v267 = vpop.permute.xlu0 %266
    %vm268 = vcmp.eq.s32.totalorder %v263, %v267
    %v269 = vsel %vm268, %v79, 0.0
    %v270 = vsel %vm90, %v269, 0.0
    %271 = vadd.xlane.f32.xlu0 %v270
    %v272 = vpop.xlane.xlu0 %271
    %v273 = vsel %vm90, %v79, 0.0
    %274 = vadd.xlane.f32.xlu0 %v273
    %v275 = vpop.xlane.xlu0 %274
    %v276 = vmul.f32 %v272, 0.9
    %v277 = vmul.f32 %v275, 0.003125
    %v278 = vadd.f32 %v276, %v277
    %v279 = vsub.f32 0.0, %v278
    %v280 = vadd.f32 %v279, %v214
    %v281 = vlog2.pop %v226
    %v282 = vmul.f32 %v281, 0.6931472
    %v283 = vadd.f32 %v280, %v282
    %v284 = vmul.f32 %v88, %v261
    %v285 = vrot.slane %v284, 4
    %v286 = vadd.f32 %v284, %v285
    %v287 = vrot.slane %v286, 2
    %v288 = vadd.f32 %v286, %v287
    %v289 = vrot.slane %v288, 1
    %v290 = vadd.f32 %v288, %v289
    %v291 = vmul.f32 %v88, %v283
    %v292 = vrot.slane %v291, 4
    %v293 = vadd.f32 %v291, %v292
    %v294 = vrot.slane %v293, 2
    %v295 = vadd.f32 %v293, %v294
    %v296 = vrot.slane %v295, 1
    %v297 = vadd.f32 %v295, %v296
    %vm298 = vcmp.eq.s32.totalorder %v263, 0
    %v299 = vsel %vm298, %v290, 0.0
    %vm300 = vcmp.eq.s32.totalorder %v263, 1
    %v301 = vsel %vm300, %v297, 0.0
    %v302 = vadd.f32 %v299, %v301
    %v303 = vmul.f32 %v88, %v198
    %v304 = vrot.slane %v303, 4
    %v305 = vadd.f32 %v303, %v304
    %v306 = vrot.slane %v305, 2
    %v307 = vadd.f32 %v305, %v306
    %v308 = vrot.slane %v307, 1
    %v309 = vadd.f32 %v307, %v308
    %vm310 = vcmp.eq.s32.totalorder %v263, 2
    %v311 = vsel %vm310, %v309, 0.0
    %v312 = vadd.f32 %v302, %v311
    %v313 = vmul.f32 %v88, %v199
    %v314 = vrot.slane %v313, 4
    %v315 = vadd.f32 %v313, %v314
    %v316 = vrot.slane %v315, 2
    %v317 = vadd.f32 %v315, %v316
    %v318 = vrot.slane %v317, 1
    %v319 = vadd.f32 %v317, %v318
    %vm320 = vcmp.eq.s32.totalorder %v263, 3
    %v321 = vsel %vm320, %v319, 0.0
    %v322 = vadd.f32 %v312, %v321
    %v323 = vmul.f32 %v88, %v200
    %v324 = vrot.slane %v323, 4
    %v325 = vadd.f32 %v323, %v324
    %v326 = vrot.slane %v325, 2
    %v327 = vadd.f32 %v325, %v326
    %v328 = vrot.slane %v327, 1
    %v329 = vadd.f32 %v327, %v328
    %vm330 = vcmp.eq.s32.totalorder %v263, 4
    %v331 = vsel %vm330, %v329, 0.0
    %v332 = vadd.f32 %v322, %v331
    %v333 = vld [vmem:[#allocation7] sm:$0x1]
    %v334 = vadd.f32 %v333, %v332
    %335 = vst [vmem:[#allocation7] sm:$0x1] %v334
    // Predicated region
    $region26: #{tpu_custom_call.1} parent=1 // pred_check
      _
    $region27: #{tpu_custom_call.1} parent=1 // pred_check_branch
      %337 = sbr.rel (0) target = $region29
    $region28: #{tpu_custom_call.1} parent=1 // pred_region
      %339 = vsyncadd [#allocation6], 0
      %s341 = sshll.u32 [#allocation7], 4
      %s342 = int_to_ptr.vmem [resolvable:$true] %s341
      %s343 = sshll.u32 %s4, 4
      %s344 = int_to_ptr.hbm [resolvable:$true] %s343
      %346 = dma.vmem_to_hbm [thread:$0]  %s342, 16, %s344, [#allocation6]
    $region29: #{tpu_custom_call.1} parent=1 // pred_fallthru
      _
    // Predicated region
    $region30: #{tpu_custom_call.1} parent=1 // pred_check
      _
    $region31: #{tpu_custom_call.1} parent=1 // pred_check_branch
      %348 = sbr.rel (0) target = $region33
    $region32: #{tpu_custom_call.1} parent=1 // pred_region
      %350 = dma.done [#allocation6], 16
    $region33: #{tpu_custom_call.1} parent=1 // pred_fallthru
      _
    %351 = vsyncpa [#allocation5], 1
    %352 = vsyncpa [#allocation6], 1

</llo_original>
